<compile_context>
chip_gen: v7x
topology: tpu7x:2x2x1
jax: 0.10.0
libtpu: 0.0.40
codegen_flags: <defaults>
</compile_context>

<pallas_src>
import jax
import jax.numpy as jnp
from jax.experimental import pallas as pl
from jax.experimental.pallas import tpu as pltpu

_LANE = 128          # class dim padded to a multiple of the 128-wide lane axis
_K_ALIGN = 512       # feature (K) dim padded to a multiple of this
_SUBLANE = 8
# Switch to the K-tiled kernel once the resident (Dp, Cp) weight block would
# exceed this many bytes (conservative for v5e's 16 MiB scoped-VMEM default
# and v7x's 64 MiB physical VMEM).
_RESIDENT_WEIGHT_BUDGET = 8 * 1024 * 1024


def _round_up(a, m):
    return ((a + m - 1) // m) * m


# ---------------------------------------------------------------------------
# Kernels
# ---------------------------------------------------------------------------
def _linear_fused_kernel(x_ref, w_ref, b_ref, o_ref):
    """One step: (tm, Dp) @ (Dp, Cp) + (1, Cp) -> (tm, Cp). Full-K resident."""
    acc = jnp.dot(x_ref[...].astype(w_ref.dtype), w_ref[...],
                  preferred_element_type=jnp.float32)
    o_ref[...] = (acc + b_ref[...]).astype(o_ref.dtype)


def _linear_ktiled_kernel(x_ref, w_ref, b_ref, o_ref, acc_ref):
    """K-tiled: accumulate (tm, tk) @ (tk, Cp) over the K grid axis."""
    k = pl.program_id(1)

    @pl.when(k == 0)
    def _():
        acc_ref[...] = jnp.zeros_like(acc_ref)

    acc_ref[...] += jnp.dot(x_ref[...].astype(w_ref.dtype), w_ref[...],
                            preferred_element_type=jnp.float32)

    @pl.when(k == pl.num_programs(1) - 1)
    def _():
        o_ref[...] = (acc_ref[...] + b_ref[...]).astype(o_ref.dtype)


# ---------------------------------------------------------------------------
# One-time parameter prep (model init, NOT per forward call)
# ---------------------------------------------------------------------------
def prepare_linear_params(weight, bias, *, compute_dtype=jnp.bfloat16,
                          mask_padded_classes=True):
    """Transpose W (C, D) -> (Dp, Cp), pad classes to 128 lanes, pad features to
    a multiple of 512, and cast the weight to bf16. Padded class columns get a
    -inf bias so padded logits are masked for softmax/argmax consumers."""
    C, D = weight.shape
    Cp = max(_LANE, _round_up(C, _LANE))
    Dp = _round_up(D, _K_ALIGN)
    w_t = jnp.zeros((Dp, Cp), dtype=compute_dtype)
    w_t = w_t.at[:D, :C].set(weight.T.astype(compute_dtype))
    pad_bias = -jnp.inf if mask_padded_classes else 0.0
    b_p = jnp.full((1, Cp), pad_bias, dtype=jnp.float32)
    b_p = b_p.at[0, :C].set(bias.astype(jnp.float32))
    return w_t, b_p


# ---------------------------------------------------------------------------
# Forward
# ---------------------------------------------------------------------------
def news_classifier_forward(x, w_t_padded, bias_padded, num_classes, *,
                            tm=512, tk=4096, return_padded=False,
                            force_ktiled=False):
    """Pallas equivalent of nn.Linear(input_dim, num_classes)(x).

    x:            (B, D)   float32
    w_t_padded:   (Dp, Cp) bf16/f32   (from prepare_linear_params)
    bias_padded:  (1, Cp)  float32    (from prepare_linear_params)
    returns       (B, num_classes) f32, or padded (B, Cp) if return_padded.
    """
    B, D = x.shape
    Dp, Cp = w_t_padded.shape
    assert D <= Dp, "x feature dim larger than prepared weight"
    if D != Dp:                                  # zero W rows contribute nothing
        x = jnp.pad(x, ((0, 0), (0, Dp - D)))

    out_dtype = x.dtype
    x_bytes = x.dtype.itemsize
    w_bytes_per = w_t_padded.dtype.itemsize

    # ---- static tiling decisions -------------------------------------------
    tm = min(tm, _round_up(B, _SUBLANE))
    if tm < B < 2 * tm:
        # two balanced M steps -> v7x's second TensorCore gets work
        tm = _round_up(pl.cdiv(B, 2), _SUBLANE)
    # keep the double-buffered x tile under ~4 MiB
    tm_cap = max(_SUBLANE, ((4 << 20) // (Dp * x_bytes)) // _SUBLANE * _SUBLANE)
    tm = max(_SUBLANE, min(tm, tm_cap))
    grid_m = pl.cdiv(B, tm)

    w_resident_bytes = Dp * Cp * w_bytes_per
    use_ktiled = force_ktiled or (w_resident_bytes > _RESIDENT_WEIGHT_BUDGET)

    bias_bytes = Cp * bias_padded.dtype.itemsize
    out_tile_bytes = tm * Cp * x_bytes

    if not use_ktiled:
        vmem_need = (w_resident_bytes + bias_bytes
                     + 2 * tm * Dp * x_bytes + 2 * out_tile_bytes)
        grid_spec = pltpu.PrefetchScalarGridSpec(
            num_scalar_prefetch=0,
            grid=(grid_m,),
            in_specs=[
                pl.BlockSpec((tm, Dp), lambda i: (i, 0)),           # x tile
                pl.BlockSpec((Dp, Cp), lambda i: (0, 0),
                             pipeline_mode=pl.Buffered(1)),         # W.T resident
                pl.BlockSpec((1, Cp), lambda i: (0, 0),
                             pipeline_mode=pl.Buffered(1)),         # bias resident
            ],
            out_specs=pl.BlockSpec((tm, Cp), lambda i: (i, 0)),
        )
        kernel = _linear_fused_kernel
        dims = ("parallel",)
    else:
        # K tile: a multiple of _K_ALIGN that divides Dp (Dp is 512-aligned).
        tk = max(_K_ALIGN, (min(tk, Dp) // _K_ALIGN) * _K_ALIGN)
        while Dp % tk:
            tk -= _K_ALIGN
        grid_k = Dp // tk
        vmem_need = (2 * tk * Cp * w_bytes_per + bias_bytes
                     + 2 * tm * tk * x_bytes + 2 * out_tile_bytes
                     + tm * Cp * 4)
        grid_spec = pltpu.PrefetchScalarGridSpec(
            num_scalar_prefetch=0,
            grid=(grid_m, grid_k),
            in_specs=[
                pl.BlockSpec((tm, tk), lambda i, k: (i, k)),        # x tile
                pl.BlockSpec((tk, Cp), lambda i, k: (k, 0)),        # W.T K-slab
                pl.BlockSpec((1, Cp), lambda i, k: (0, 0),
                             pipeline_mode=pl.Buffered(1)),         # bias resident
            ],
            out_specs=pl.BlockSpec((tm, Cp), lambda i, k: (i, 0)),
            scratch_shapes=[pltpu.VMEM((tm, Cp), jnp.float32)],
        )
        kernel = _linear_ktiled_kernel
        dims = ("parallel", "arbitrary")

    vmem_limit = int(min(max(int(vmem_need * 1.5) + (2 << 20), 32 << 20),
                         64 << 20))

    out_padded = pl.pallas_call(
        kernel,
        out_shape=jax.ShapeDtypeStruct((B, Cp), out_dtype),
        grid_spec=grid_spec,
        compiler_params=pltpu.CompilerParams(
            dimension_semantics=dims,
            vmem_limit_bytes=vmem_limit,
        ),
    )(x, w_t_padded, bias_padded)

    if return_padded:
        # Padded class columns are -inf (masked in the bias), so this lane-dense
        # (B, 128) block feeds softmax/argmax/loss directly with no narrow slice.
        return out_padded
    return out_padded[:, :num_classes]


if __name__ == "__main__":
    # Shapes consistent with the module: input_dim = TF-IDF feature dim,
    # num_classes = 20 (20 newsgroups). Small demo batch.
    B, D, C = 8, 512, 20

    key = jax.random.PRNGKey(0)
    kx, kw, kb, kx2, kw2, kb2 = jax.random.split(key, 6)

    x = jax.random.normal(kx, (B, D), dtype=jnp.float32)
    bound = 1.0 / float(jnp.sqrt(jnp.float32(D)))
    weight = jax.random.uniform(kw, (C, D), jnp.float32, -bound, bound)
    bias = jax.random.uniform(kb, (C,), jnp.float32, -bound, bound)

    # One-time prep (transpose + padding + bf16 cast) — init-time cost only.
    w_t_p, b_p = prepare_linear_params(weight, bias)
    jax.block_until_ready((w_t_p, b_p))

    # Fused (full-K resident weight) path; padded logits masked to -inf.
    out_pad = news_classifier_forward(x, w_t_p, b_p, C, return_padded=True)
    out_pad = jax.block_until_ready(out_pad)
    assert out_pad.shape == (B, 128)

    ref = x @ weight.T + bias
    assert jnp.allclose(out_pad[:, :C], ref, atol=2e-2, rtol=2e-2), \
        "fused path mismatch vs reference"
    assert bool(jnp.all(jnp.isneginf(out_pad[:, C:]))), \
        "padded class columns should be masked to -inf"

    # Exercise the K-tiled fallback (used automatically at large TF-IDF dims).
    B2, D2 = 16, 1024
    bound2 = 1.0 / float(jnp.sqrt(jnp.float32(D2)))
    x2 = jax.random.normal(kx2, (B2, D2), dtype=jnp.float32)
    weight2 = jax.random.uniform(kw2, (C, D2), jnp.float32, -bound2, bound2)
    bias2 = jax.random.uniform(kb2, (C,), jnp.float32, -bound2, bound2)
    w_t_p2, b_p2 = prepare_linear_params(weight2, bias2)
    out2 = news_classifier_forward(x2, w_t_p2, b_p2, C,
                                   force_ktiled=True, tk=512)
    out2 = jax.block_until_ready(out2)
    ref2 = x2 @ weight2.T + bias2
    assert out2.shape == (B2, C)
    assert jnp.allclose(out2, ref2, atol=3e-2, rtol=3e-2), \
        "K-tiled path mismatch vs reference"

    print("KERNEL_OK")
</pallas_src>

<mosaic_0001>
module attributes {stable_mosaic.version = 11 : i64} {
  func.func @_linear_fused_kernel(%arg0: i32, %arg1: memref<8x512xf32, #tpu.memory_space<vmem>>, %arg2: memref<512x128xbf16, #tpu.memory_space<vmem>>, %arg3: memref<1x128xf32, #tpu.memory_space<vmem>>, %arg4: memref<8x128xf32, #tpu.memory_space<vmem>>) attributes {dimension_semantics = [#tpu.dimension_semantics<parallel>], iteration_bounds = array<i64: 1>, scalar_prefetch = 0 : i64, scratch_operands = 0 : i64, tpu.core_type = #tpu.core_type<tc>, window_params = [{transform_indices = @transform_0, window_bounds = array<i64: 8, 512>}, {pipeline_mode = #tpu.pipeline_mode<synchronous>, transform_indices = @transform_1, window_bounds = array<i64: 512, 128>}, {pipeline_mode = #tpu.pipeline_mode<synchronous>, transform_indices = @transform_2, window_bounds = array<i64: 1, 128>}, {transform_indices = @transform_3, window_bounds = array<i64: 8, 128>}]} {
    %c0 = arith.constant 0 : index
    %c0_0 = arith.constant 0 : index
    %0 = vector.load %arg1[%c0, %c0_0] : memref<8x512xf32, #tpu.memory_space<vmem>>, vector<8x512xf32>
    %1 = arith.truncf %0 : vector<8x512xf32> to vector<8x512xbf16>
    %c0_1 = arith.constant 0 : index
    %c0_2 = arith.constant 0 : index
    %2 = vector.load %arg2[%c0_1, %c0_2] : memref<512x128xbf16, #tpu.memory_space<vmem>>, vector<512x128xbf16>
    %cst = arith.constant dense<0.000000e+00> : vector<8x128xf32>
    %3 = tpu.matmul %1, %2, %cst {dimension_numbers = #tpu.dot_dimension_numbers<[1], [0], [0], [1], [0, 0, 1, 1], [], []>} : vector<8x512xbf16>, vector<512x128xbf16>, vector<8x128xf32> -> vector<8x128xf32>
    %c0_3 = arith.constant 0 : index
    %c0_4 = arith.constant 0 : index
    %4 = vector.load %arg3[%c0_3, %c0_4] : memref<1x128xf32, #tpu.memory_space<vmem>>, vector<1x128xf32>
    %5 = vector.broadcast %4 : vector<1x128xf32> to vector<8x128xf32>
    %6 = arith.addf %3, %5 : vector<8x128xf32>
    %c0_5 = arith.constant 0 : index
    %c0_6 = arith.constant 0 : index
    %7 = vector.load %arg4[%c0_5, %c0_6] : memref<8x128xf32, #tpu.memory_space<vmem>>, vector<8x128xf32>
    tpu.vector_store %arg4[%c0_5, %c0_6], %6 {strides = array<i32>} : memref<8x128xf32, #tpu.memory_space<vmem>>, vector<8x128xf32>,
    return
  }
  func.func @transform_0(%arg0: i32) -> (i32, i32) {
    %c0_i32 = arith.constant 0 : i32
    %c0_i32_0 = arith.constant 0 : i32
    return %arg0, %c0_i32 : i32, i32
  }
  func.func @transform_1(%arg0: i32) -> (i32, i32) {
    %c0_i32 = arith.constant 0 : i32
    %c0_i32_0 = arith.constant 0 : i32
    %c0_i32_1 = arith.constant 0 : i32
    return %c0_i32, %c0_i32_0 : i32, i32
  }
  func.func @transform_2(%arg0: i32) -> (i32, i32) {
    %c0_i32 = arith.constant 0 : i32
    %c0_i32_0 = arith.constant 0 : i32
    %c0_i32_1 = arith.constant 0 : i32
    return %c0_i32, %c0_i32_0 : i32, i32
  }
  func.func @transform_3(%arg0: i32) -> (i32, i32) {
    %c0_i32 = arith.constant 0 : i32
    %c0_i32_0 = arith.constant 0 : i32
    return %arg0, %c0_i32 : i32, i32
  }
}

</mosaic_0001>

<llo_original>
// kernel: tpu_custom_call.1
$region0: #{tpu_custom_call.1}
  #allocation0 [shape = 'u32[]', space=smem, size = 0x4, offset = 0x4, fixed_abs, tag = 'smem constant byte address 0x4 - core index']
  #allocation1 [shape = 'u32[144,128]{1,0:T(1,128)}', space=vmem, size = 0x12000, scoped, tag = 'internal scratch']
  %s0 = inlined_call_operand.hbm [shape: f32[8,512], index: 0, kind: input, shape index: {}]
  %s1 = inlined_call_operand.hbm [shape: bf16[512,128], index: 1, kind: input, shape index: {}]
  %s2 = inlined_call_operand.vmem [shape: f32[1,128], index: 2, kind: input, shape index: {}]
  %s3 = inlined_call_operand.hbm [shape: f32[8,128], index: 3, kind: output, shape index: {}]
  %s4 = sld [smem:[#allocation0]]
  $region30: #{tpu_custom_call.1} parent=0
    _
  %s6 = ssub.s32 1, %s4
  %s7 = scalar_select 0, %s6, %s4
  $region1: #{tpu_custom_call.1} parent=0
    #allocation2 [shape = 'u8[16384]{0}', space=vmem, size = 0x4000, scoped, tag = 'input window, operand 0, single buffered']
    #allocation3 [shape = 's32[1]{0}', space=sflag, size = 0x4, scoped, tag = 'scoped memory for tpu_custom_call.1']
    #allocation4 [shape = 's32[1]{0}', space=sflag, size = 0x4, scoped, tag = 'scoped memory for tpu_custom_call.1']
    #allocation5 [shape = 'u8[131072]{0}', space=vmem, size = 0x20000, scoped, tag = 'input window, operand 1, single buffered']
    #allocation6 [shape = 's32[1]{0}', space=sflag, size = 0x4, scoped, tag = 'scoped memory for tpu_custom_call.1']
    #allocation7 [shape = 'u8[4096]{0}', space=vmem, size = 0x1000, scoped, tag = 'output window, operand 0, single buffered']
    %8 = vsyncpa [#allocation3], 0
    %9 = vsyncpa [#allocation6], 0
    %10 = vsyncpa [#allocation4], 0
    // Predicated region
    $region2: #{tpu_custom_call.1} parent=1 // pred_check
      _
    $region3: #{tpu_custom_call.1} parent=1 // pred_check_branch
      %12 = sbr.rel (0) target = $region5
    $region4: #{tpu_custom_call.1} parent=1 // pred_region
      %s14 = ssub.s32 512, 512
      %15 = vsyncadd [#allocation3], %s14
      %s17 = sshll.u32 [#allocation2], 4
      %s18 = int_to_ptr.vmem [resolvable:$true] %s17
      %20 = dma.hbm_to_vmem [thread:$0]  %s0, 512, %s18, [#allocation3]
    $region5: #{tpu_custom_call.1} parent=1 // pred_fallthru
      _
    // Predicated region
    $region6: #{tpu_custom_call.1} parent=1 // pred_check
      _
    $region7: #{tpu_custom_call.1} parent=1 // pred_check_branch
      %22 = sbr.rel (0) target = $region9
    $region8: #{tpu_custom_call.1} parent=1 // pred_region
      %s24 = ssub.s32 4096, 4096
      %25 = vsyncadd [#allocation6], %s24
      %s26 = sshll.u32 [#allocation5], 4
      %s27 = int_to_ptr.vmem [resolvable:$true] %s26
      %32 = dma.hbm_to_vmem [thread:$0]  %s1, 4096, %s27, [#allocation6], 64, 64, 4
    $region9: #{tpu_custom_call.1} parent=1 // pred_fallthru
      _
    // Predicated region
    $region10: #{tpu_custom_call.1} parent=1 // pred_check
      _
    $region11: #{tpu_custom_call.1} parent=1 // pred_check_branch
      %34 = sbr.rel (0) target = $region13
    $region12: #{tpu_custom_call.1} parent=1 // pred_region
      _
    $region13: #{tpu_custom_call.1} parent=1 // pred_fallthru
      _
    // Predicated region
    $region14: #{tpu_custom_call.1} parent=1 // pred_check
      _
    $region15: #{tpu_custom_call.1} parent=1 // pred_check_branch
      %36 = sbr.rel (0) target = $region17
    $region16: #{tpu_custom_call.1} parent=1 // pred_region
      %37 = dma.done [#allocation3], 512
    $region17: #{tpu_custom_call.1} parent=1 // pred_fallthru
      _
    // Predicated region
    $region18: #{tpu_custom_call.1} parent=1 // pred_check
      _
    $region19: #{tpu_custom_call.1} parent=1 // pred_check_branch
      %39 = sbr.rel (0) target = $region21
    $region20: #{tpu_custom_call.1} parent=1 // pred_region
      %40 = dma.done [#allocation6], 4096
    $region21: #{tpu_custom_call.1} parent=1 // pred_fallthru
      _
    %v42 = vld [vmem:[#allocation2] sm:$0xff]
    %v43 = vld [vmem:[#allocation2 + $0x8] sm:$0xff]
    %v44 = vld [vmem:[#allocation2 + $0x10] sm:$0xff]
    %v45 = vld [vmem:[#allocation2 + $0x18] sm:$0xff]
    %v46 = vpack.c.bf16 %v42, %v42
    %v47 = vpack.c.bf16 %v43, %v43
    %v48 = vpack.c.bf16 %v44, %v44
    %v49 = vpack.c.bf16 %v45, %v45
    %v50 = vld [vmem:[#allocation5] sm:$0xf]
    %v51 = vld [vmem:[#allocation5 + $0x4] sm:$0xf]
    %v52 = vld [vmem:[#allocation5 + $0x8] sm:$0xf]
    %v53 = vld [vmem:[#allocation5 + $0xc] sm:$0xf]
    %v54 = vld [vmem:[#allocation5 + $0x10] sm:$0xf]
    %v55 = vld [vmem:[#allocation5 + $0x14] sm:$0xf]
    %v56 = vld [vmem:[#allocation5 + $0x18] sm:$0xf]
    %v57 = vld [vmem:[#allocation5 + $0x1c] sm:$0xf]
    %v58 = vld [vmem:[#allocation5 + $0x20] sm:$0xf]
    %v59 = vld [vmem:[#allocation5 + $0x24] sm:$0xf]
    %v60 = vld [vmem:[#allocation5 + $0x28] sm:$0xf]
    %v61 = vld [vmem:[#allocation5 + $0x2c] sm:$0xf]
    %v62 = vld [vmem:[#allocation5 + $0x30] sm:$0xf]
    %v63 = vld [vmem:[#allocation5 + $0x34] sm:$0xf]
    %v64 = vld [vmem:[#allocation5 + $0x38] sm:$0xf]
    %v65 = vld [vmem:[#allocation5 + $0x3c] sm:$0xf]
    %v66 = vld [vmem:[#allocation5 + $0x40] sm:$0xf]
    %v67 = vld [vmem:[#allocation5 + $0x44] sm:$0xf]
    %v68 = vld [vmem:[#allocation5 + $0x48] sm:$0xf]
    %v69 = vld [vmem:[#allocation5 + $0x4c] sm:$0xf]
    %v70 = vld [vmem:[#allocation5 + $0x50] sm:$0xf]
    %v71 = vld [vmem:[#allocation5 + $0x54] sm:$0xf]
    %v72 = vld [vmem:[#allocation5 + $0x58] sm:$0xf]
    %v73 = vld [vmem:[#allocation5 + $0x5c] sm:$0xf]
    %v74 = vld [vmem:[#allocation5 + $0x60] sm:$0xf]
    %v75 = vld [vmem:[#allocation5 + $0x64] sm:$0xf]
    %v76 = vld [vmem:[#allocation5 + $0x68] sm:$0xf]
    %v77 = vld [vmem:[#allocation5 + $0x6c] sm:$0xf]
    %v78 = vld [vmem:[#allocation5 + $0x70] sm:$0xf]
    %v79 = vld [vmem:[#allocation5 + $0x74] sm:$0xf]
    %v80 = vld [vmem:[#allocation5 + $0x78] sm:$0xf]
    %v81 = vld [vmem:[#allocation5 + $0x7c] sm:$0xf]
    %v82 = vld [vmem:[#allocation5 + $0x80] sm:$0xf]
    %v83 = vld [vmem:[#allocation5 + $0x84] sm:$0xf]
    %v84 = vld [vmem:[#allocation5 + $0x88] sm:$0xf]
    %v85 = vld [vmem:[#allocation5 + $0x8c] sm:$0xf]
    %v86 = vld [vmem:[#allocation5 + $0x90] sm:$0xf]
    %v87 = vld [vmem:[#allocation5 + $0x94] sm:$0xf]
    %v88 = vld [vmem:[#allocation5 + $0x98] sm:$0xf]
    %v89 = vld [vmem:[#allocation5 + $0x9c] sm:$0xf]
    %v90 = vld [vmem:[#allocation5 + $0xa0] sm:$0xf]
    %v91 = vld [vmem:[#allocation5 + $0xa4] sm:$0xf]
    %v92 = vld [vmem:[#allocation5 + $0xa8] sm:$0xf]
    %v93 = vld [vmem:[#allocation5 + $0xac] sm:$0xf]
    %v94 = vld [vmem:[#allocation5 + $0xb0] sm:$0xf]
    %v95 = vld [vmem:[#allocation5 + $0xb4] sm:$0xf]
    %v96 = vld [vmem:[#allocation5 + $0xb8] sm:$0xf]
    %v97 = vld [vmem:[#allocation5 + $0xbc] sm:$0xf]
    %v98 = vld [vmem:[#allocation5 + $0xc0] sm:$0xf]
    %v99 = vld [vmem:[#allocation5 + $0xc4] sm:$0xf]
    %v100 = vld [vmem:[#allocation5 + $0xc8] sm:$0xf]
    %v101 = vld [vmem:[#allocation5 + $0xcc] sm:$0xf]
    %v102 = vld [vmem:[#allocation5 + $0xd0] sm:$0xf]
    %v103 = vld [vmem:[#allocation5 + $0xd4] sm:$0xf]
    %v104 = vld [vmem:[#allocation5 + $0xd8] sm:$0xf]
    %v105 = vld [vmem:[#allocation5 + $0xdc] sm:$0xf]
    %v106 = vld [vmem:[#allocation5 + $0xe0] sm:$0xf]
    %v107 = vld [vmem:[#allocation5 + $0xe4] sm:$0xf]
    %v108 = vld [vmem:[#allocation5 + $0xe8] sm:$0xf]
    %v109 = vld [vmem:[#allocation5 + $0xec] sm:$0xf]
    %v110 = vld [vmem:[#allocation5 + $0xf0] sm:$0xf]
    %v111 = vld [vmem:[#allocation5 + $0xf4] sm:$0xf]
    %v112 = vld [vmem:[#allocation5 + $0xf8] sm:$0xf]
    %v113 = vld [vmem:[#allocation5 + $0xfc] sm:$0xf]
    %v114 = vld [vmem:[%s2] sm:$0x1]
    %v116 = vlaneseq
    %v117 = vshrl.u32 %v116, 7
    %v118 = vsub.s32 0, %v117
    %v119 = vrot.slane %v114, %v118
    %v185 = vunpack.c.l.b16 %v50
    %v186 = vunpack.c.l.b16 %v51
    %v187 = vunpack.c.l.b16 %v52
    %v188 = vunpack.c.l.b16 %v53
    %v189 = vunpack.c.l.b16 %v54
    %v190 = vunpack.c.l.b16 %v55
    %v191 = vunpack.c.l.b16 %v56
    %v192 = vunpack.c.l.b16 %v57
    %v193 = vunpack.c.l.b16 %v58
    %v194 = vunpack.c.l.b16 %v59
    %v195 = vunpack.c.l.b16 %v60
    %v196 = vunpack.c.l.b16 %v61
    %v197 = vunpack.c.l.b16 %v62
    %v198 = vunpack.c.l.b16 %v63
    %v199 = vunpack.c.l.b16 %v64
    %v200 = vunpack.c.l.b16 %v65
    %v201 = vunpack.c.l.b16 %v66
    %v202 = vunpack.c.l.b16 %v67
    %v203 = vunpack.c.l.b16 %v68
    %v204 = vunpack.c.l.b16 %v69
    %v205 = vunpack.c.l.b16 %v70
    %v206 = vunpack.c.l.b16 %v71
    %v207 = vunpack.c.l.b16 %v72
    %v208 = vunpack.c.l.b16 %v73
    %v209 = vunpack.c.l.b16 %v74
    %v210 = vunpack.c.l.b16 %v75
    %v211 = vunpack.c.l.b16 %v76
    %v212 = vunpack.c.l.b16 %v77
    %v213 = vunpack.c.l.b16 %v78
    %v214 = vunpack.c.l.b16 %v79
    %v215 = vunpack.c.l.b16 %v80
    %v216 = vunpack.c.l.b16 %v81
    %v217 = vunpack.c.l.b16 %v82
    %v218 = vunpack.c.l.b16 %v83
    %v219 = vunpack.c.l.b16 %v84
    %v220 = vunpack.c.l.b16 %v85
    %v221 = vunpack.c.l.b16 %v86
    %v222 = vunpack.c.l.b16 %v87
    %v223 = vunpack.c.l.b16 %v88
    %v224 = vunpack.c.l.b16 %v89
    %v225 = vunpack.c.l.b16 %v90
    %v226 = vunpack.c.l.b16 %v91
    %v227 = vunpack.c.l.b16 %v92
    %v228 = vunpack.c.l.b16 %v93
    %v229 = vunpack.c.l.b16 %v94
    %v230 = vunpack.c.l.b16 %v95
    %v231 = vunpack.c.l.b16 %v96
    %v232 = vunpack.c.l.b16 %v97
    %v233 = vunpack.c.l.b16 %v98
    %v234 = vunpack.c.l.b16 %v99
    %v235 = vunpack.c.l.b16 %v100
    %v236 = vunpack.c.l.b16 %v101
    %v237 = vunpack.c.l.b16 %v102
    %v238 = vunpack.c.l.b16 %v103
    %v239 = vunpack.c.l.b16 %v104
    %v240 = vunpack.c.l.b16 %v105
    %v241 = vunpack.c.l.b16 %v106
    %v242 = vunpack.c.l.b16 %v107
    %v243 = vunpack.c.l.b16 %v108
    %v244 = vunpack.c.l.b16 %v109
    %v245 = vunpack.c.l.b16 %v110
    %v246 = vunpack.c.l.b16 %v111
    %v247 = vunpack.c.l.b16 %v112
    %v248 = vunpack.c.l.b16 %v113
    %v249 = vpack.c.b16 %v186, %v185
    %v250 = vpack.c.b16 %v188, %v187
    %v251 = vpack.c.b16 %v190, %v189
    %v252 = vpack.c.b16 %v192, %v191
    %v253 = vpack.c.b16 %v194, %v193
    %v254 = vpack.c.b16 %v196, %v195
    %v255 = vpack.c.b16 %v198, %v197
    %v256 = vpack.c.b16 %v200, %v199
    %v257 = vpack.c.b16 %v202, %v201
    %v258 = vpack.c.b16 %v204, %v203
    %v259 = vpack.c.b16 %v206, %v205
    %v260 = vpack.c.b16 %v208, %v207
    %v261 = vpack.c.b16 %v210, %v209
    %v262 = vpack.c.b16 %v212, %v211
    %v263 = vpack.c.b16 %v214, %v213
    %v264 = vpack.c.b16 %v216, %v215
    %v265 = vpack.c.b16 %v218, %v217
    %v266 = vpack.c.b16 %v220, %v219
    %v267 = vpack.c.b16 %v222, %v221
    %v268 = vpack.c.b16 %v224, %v223
    %v269 = vpack.c.b16 %v226, %v225
    %v270 = vpack.c.b16 %v228, %v227
    %v271 = vpack.c.b16 %v230, %v229
    %v272 = vpack.c.b16 %v232, %v231
    %v273 = vpack.c.b16 %v234, %v233
    %v274 = vpack.c.b16 %v236, %v235
    %v275 = vpack.c.b16 %v238, %v237
    %v276 = vpack.c.b16 %v240, %v239
    %v277 = vpack.c.b16 %v242, %v241
    %v278 = vpack.c.b16 %v244, %v243
    %v279 = vpack.c.b16 %v246, %v245
    %v280 = vpack.c.b16 %v248, %v247
    %313 = vmatprep.subr.bf16.mxu0 0
    %314 = vmatpush1.bf16.msra.mxu0 %v249
    %315 = vmatprep.subr.bf16.mxu0 0
    %316 = vmatpush1.bf16.msra.mxu0 %v250
    %317 = vmatprep.subr.bf16.mxu0 0
    %318 = vmatpush1.bf16.msra.mxu0 %v251
    %319 = vmatprep.subr.bf16.mxu0 0
    %320 = vmatpush1.bf16.msra.mxu0 %v252
    %321 = vmatprep.subr.bf16.mxu0 0
    %322 = vmatpush1.bf16.msra.mxu0 %v253
    %323 = vmatprep.subr.bf16.mxu0 0
    %324 = vmatpush1.bf16.msra.mxu0 %v254
    %325 = vmatprep.subr.bf16.mxu0 0
    %326 = vmatpush1.bf16.msra.mxu0 %v255
    %327 = vmatprep.subr.bf16.mxu0 0
    %328 = vmatpush1.bf16.msra.mxu0 %v256
    %329 = vmatprep.subr.bf16.mxu0 0
    %330 = vmatpush1.bf16.msra.mxu0 %v257
    %331 = vmatprep.subr.bf16.mxu0 0
    %332 = vmatpush1.bf16.msra.mxu0 %v258
    %333 = vmatprep.subr.bf16.mxu0 0
    %334 = vmatpush1.bf16.msra.mxu0 %v259
    %335 = vmatprep.subr.bf16.mxu0 0
    %336 = vmatpush1.bf16.msra.mxu0 %v260
    %337 = vmatprep.subr.bf16.mxu0 0
    %338 = vmatpush1.bf16.msra.mxu0 %v261
    %339 = vmatprep.subr.bf16.mxu0 0
    %340 = vmatpush1.bf16.msra.mxu0 %v262
    %341 = vmatprep.subr.bf16.mxu0 0
    %342 = vmatpush1.bf16.msra.mxu0 %v263
    %343 = vmatprep.subr.bf16.mxu0 0
    %344 = vmatpush1.bf16.msra.mxu0 %v264
    %345 = vmatprep.mubr.bf16.mxu0 %v47
    %346 = vmatmul.mubr.bf16.gmra.mrb[0].mxu0 %v46
    %v347 = vpop.f32.mrb[0].mxu0
    %v348 = vadd.f32 %v119, %v347
    %v349 = vpop.f32.mrb[0].mxu0
    %v350 = vpop.f32.mrb[0].mxu0
    %v351 = vpop.f32.mrb[0].mxu0
    %352 = vdwg.mxu0
    %353 = vmatprep.subr.bf16.mxu0 0
    %354 = vmatpush1.bf16.msra.mxu0 %v265
    %355 = vmatprep.subr.bf16.mxu0 0
    %356 = vmatpush1.bf16.msra.mxu0 %v266
    %357 = vmatprep.subr.bf16.mxu0 0
    %358 = vmatpush1.bf16.msra.mxu0 %v267
    %359 = vmatprep.subr.bf16.mxu0 0
    %360 = vmatpush1.bf16.msra.mxu0 %v268
    %361 = vmatprep.subr.bf16.mxu0 0
    %362 = vmatpush1.bf16.msra.mxu0 %v269
    %363 = vmatprep.subr.bf16.mxu0 0
    %364 = vmatpush1.bf16.msra.mxu0 %v270
    %365 = vmatprep.subr.bf16.mxu0 0
    %366 = vmatpush1.bf16.msra.mxu0 %v271
    %367 = vmatprep.subr.bf16.mxu0 0
    %368 = vmatpush1.bf16.msra.mxu0 %v272
    %369 = vmatprep.subr.bf16.mxu0 0
    %370 = vmatpush1.bf16.msra.mxu0 %v273
    %371 = vmatprep.subr.bf16.mxu0 0
    %372 = vmatpush1.bf16.msra.mxu0 %v274
    %373 = vmatprep.subr.bf16.mxu0 0
    %374 = vmatpush1.bf16.msra.mxu0 %v275
    %375 = vmatprep.subr.bf16.mxu0 0
    %376 = vmatpush1.bf16.msra.mxu0 %v276
    %377 = vmatprep.subr.bf16.mxu0 0
    %378 = vmatpush1.bf16.msra.mxu0 %v277
    %379 = vmatprep.subr.bf16.mxu0 0
    %380 = vmatpush1.bf16.msra.mxu0 %v278
    %381 = vmatprep.subr.bf16.mxu0 0
    %382 = vmatpush1.bf16.msra.mxu0 %v279
    %383 = vmatprep.subr.bf16.mxu0 0
    %384 = vmatpush1.bf16.msra.mxu0 %v280
    %385 = vmatprep.mubr.bf16.mxu0 %v49
    %386 = vmatmul.mubr.bf16.gmra.mrb[0].mxu0 %v48
    %v387 = vpop.f32.mrb[0].mxu0
    %v388 = vadd.f32 %v348, %v387
    %v389 = vpop.f32.mrb[0].mxu0
    %v390 = vpop.f32.mrb[0].mxu0
    %v391 = vpop.f32.mrb[0].mxu0
    %392 = vdwg.mxu0
    %393 = vst [vmem:[#allocation7] sm:$0xff] %v388
    // Predicated region
    $region22: #{tpu_custom_call.1} parent=1 // pred_check
      _
    $region23: #{tpu_custom_call.1} parent=1 // pred_check_branch
      %395 = sbr.rel (0) target = $region25
    $region24: #{tpu_custom_call.1} parent=1 // pred_region
      %s397 = ssub.s32 128, 128
      %398 = vsyncadd [#allocation4], %s397
      %s400 = sshll.u32 [#allocation7], 4
      %s401 = int_to_ptr.vmem [resolvable:$true] %s400
      %403 = dma.vmem_to_hbm [thread:$0]  %s401, 128, %s3, [#allocation4]
    $region25: #{tpu_custom_call.1} parent=1 // pred_fallthru
      _
    // Predicated region
    $region26: #{tpu_custom_call.1} parent=1 // pred_check
      _
    $region27: #{tpu_custom_call.1} parent=1 // pred_check_branch
      %405 = sbr.rel (0) target = $region29
    $region28: #{tpu_custom_call.1} parent=1 // pred_region
      %406 = dma.done [#allocation4], 128
    $region29: #{tpu_custom_call.1} parent=1 // pred_fallthru
      _
    %407 = vsyncpa [#allocation3], 1
    %408 = vsyncpa [#allocation6], 1
    %409 = vsyncpa [#allocation4], 1

</llo_original>
